<compile_context>
chip_gen: v6e
topology: v6e:2x2x1
jax: 0.10.0
libtpu: 0.0.40
codegen_flags: <defaults>
</compile_context>

<pallas_src>
import jax
import jax.numpy as jnp
from jax import lax
from jax.experimental import pallas as pl
from jax.experimental.pallas import tpu as pltpu

LAYERS = [2, 5, 5, 5, 5, 1]          # same default as the PyTorch module
NUM_LAYERS = len(LAYERS) - 1         # 5 Linear layers
FPAD = 8                             # padded feature stride inside the flat params
CHUNK = 8                            # sublane rows per inner step (8*128 = 1024 samples)
TB_MAX = 1024                        # max rows (of 128 lanes) per grid step -> 131072 samples


def _read_scalar_params(w_ref, b_ref):
    """Read all real weight/bias scalars from SMEM once (hoisted out of the
    per-chunk loop)."""
    w, b = [], []
    for li in range(NUM_LAYERS):
        fin, fout = LAYERS[li], LAYERS[li + 1]
        w.append([[w_ref[li * FPAD * FPAD + j * FPAD + i] for i in range(fin)]
                  for j in range(fout)])
        b.append([b_ref[li * FPAD + j] for j in range(fout)])
    return w, b


def mlp_kernel(x_ref, w_ref, b_ref, o_ref):
    """Whole MLP for one (F, TB, 128) batch tile; batch fills sublanes+lanes.

    x_ref: (2, TB, 128)             VMEM activations (feature = leading dim)
    w_ref: (NUM_LAYERS*FPAD*FPAD,)  SMEM packed weights, W[li][j][i] at li*64+j*8+i
    b_ref: (NUM_LAYERS*FPAD,)       SMEM packed biases,  b[li][j]    at li*8+j
    o_ref: (1, TB, 128)             VMEM output feature
    """
    w, b = _read_scalar_params(w_ref, b_ref)
    n_chunks = x_ref.shape[1] // CHUNK

    def chunk(r):
        # r = sublane-row offset of this 1024-sample slab; everything below
        # stays in vregs until the single output store.
        h = [x_ref[i, pl.ds(r, CHUNK), :] for i in range(LAYERS[0])]
        for li in range(NUM_LAYERS):
            fin, fout = LAYERS[li], LAYERS[li + 1]
            nh = []
            for j in range(fout):
                acc = h[0] * w[li][j][0]                     # scalar x vreg (VPU)
                for i in range(1, fin):
                    acc = acc + h[i] * w[li][j][i]
                acc = acc + b[li][j]
                if li != NUM_LAYERS - 1:
                    acc = jnp.tanh(acc)                      # EUP
                nh.append(acc)
            h = nh
        o_ref[0, pl.ds(r, CHUNK), :] = h[0]

    if n_chunks <= 8:
        for c in range(n_chunks):                            # small tiles: full unroll
            chunk(c * CHUNK)
    else:
        def body(c, carry):
            chunk(pl.multiple_of(c * CHUNK, CHUNK))
            return carry
        lax.fori_loop(0, n_chunks, body, 0,
                      unroll=2 if n_chunks % 2 == 0 else 1)


def init_params(key):
    """Deterministic torch.nn.Linear-style init: U(-1/sqrt(fan_in), 1/sqrt(fan_in)).
    Weights kept in torch layout (out_features, in_features)."""
    params = []
    keys = jax.random.split(key, NUM_LAYERS)
    for k, fan_in, fan_out in zip(keys, LAYERS[:-1], LAYERS[1:]):
        kw, kb = jax.random.split(k)
        bound = 1.0 / (fan_in ** 0.5)
        W = jax.random.uniform(kw, (fan_out, fan_in), jnp.float32, -bound, bound)
        bvec = jax.random.uniform(kb, (fan_out,), jnp.float32, -bound, bound)
        params.append((W, bvec))
    return params


def pack_params(params):
    """Pack all layers into flat 1-D weight/bias arrays (SMEM-friendly)."""
    w_all = jnp.zeros((NUM_LAYERS, FPAD, FPAD), jnp.float32)
    b_all = jnp.zeros((NUM_LAYERS, FPAD), jnp.float32)
    for li, (W, bvec) in enumerate(params):
        fout, fin = W.shape
        w_all = w_all.at[li, :fout, :fin].set(W)             # [layer, out, in]
        b_all = b_all.at[li, :fout].set(bvec)
    return w_all.reshape(-1), b_all.reshape(-1)


def diffusion_nn_forward(x, w_flat, b_flat):
    """x: (N, 2) float32 -> (N, 1) float32 (matches the PyTorch module)."""
    N, fin = x.shape
    fout = LAYERS[-1]

    rows = pl.cdiv(N, 128)                                   # 128-sample rows of batch
    tb = min(TB_MAX, ((rows + 7) // 8) * 8)                  # rows per grid step (mult of 8)
    steps = pl.cdiv(rows, tb)
    rows_p = steps * tb
    n_pad = rows_p * 128

    # Layout plumbing only (batch-major -> feature-major + zero pad).  In a
    # surrounding diffusion/sampling loop keep the (features, N) layout
    # end-to-end and skip this pass.
    xp = jnp.zeros((fin, n_pad), jnp.float32).at[:, :N].set(x.T)
    xp = xp.reshape(fin, rows_p, 128)

    out = pl.pallas_call(
        mlp_kernel,
        out_shape=jax.ShapeDtypeStruct((fout, rows_p, 128), jnp.float32),
        grid=(steps,),
        in_specs=[
            pl.BlockSpec((fin, tb, 128), lambda i: (0, i, 0)),       # activation tile
            pl.BlockSpec(memory_space=pltpu.MemorySpace.SMEM),       # packed weights
            pl.BlockSpec(memory_space=pltpu.MemorySpace.SMEM),       # packed biases
        ],
        out_specs=pl.BlockSpec((fout, tb, 128), lambda i: (0, i, 0)),
        compiler_params=pltpu.CompilerParams(
            dimension_semantics=("parallel",),
            vmem_limit_bytes=32 * 1024 * 1024),
    )(xp, w_flat, b_flat)

    return out.reshape(fout, n_pad)[:, :N].T


def reference_forward(x, params):
    """Plain-JAX reference matching the PyTorch nn.Sequential semantics."""
    h = x
    for li, (W, bvec) in enumerate(params):
        h = h @ W.T + bvec
        if li != len(params) - 1:
            h = jnp.tanh(h)
    return h


if __name__ == "__main__":
    key = jax.random.PRNGKey(0)
    kx, kp = jax.random.split(key)

    params = init_params(kp)
    w_flat, b_flat = pack_params(params)
    fwd = jax.jit(diffusion_nn_forward)

    # Two small batches: one exercises the fully-unrolled small-tile path,
    # the other the strip-mined fori_loop path.
    for n in (300, 10000):
        x = jax.random.normal(jax.random.fold_in(kx, n), (n, LAYERS[0]),
                              dtype=jnp.float32)
        y = fwd(x, w_flat, b_flat)
        jax.block_until_ready(y)
        y_ref = reference_forward(x, params)
        assert y.shape == (n, LAYERS[-1]), y.shape
        err = float(jnp.max(jnp.abs(y - y_ref)))
        assert jnp.allclose(y, y_ref, atol=1e-5, rtol=1e-4), err

    print("KERNEL_OK")
</pallas_src>

<mosaic_0001>
module attributes {stable_mosaic.version = 11 : i64} {
  func.func @mlp_kernel(%arg0: i32, %arg1: memref<2x8x128xf32, #tpu.memory_space<vmem>>, %arg2: memref<320xf32, #tpu.memory_space<smem>>, %arg3: memref<40xf32, #tpu.memory_space<smem>>, %arg4: memref<1x8x128xf32, #tpu.memory_space<vmem>>) attributes {dimension_semantics = [#tpu.dimension_semantics<parallel>], iteration_bounds = array<i64: 1>, scalar_prefetch = 0 : i64, scratch_operands = 0 : i64, tpu.core_type = #tpu.core_type<tc>, window_params = [{transform_indices = @transform_0, window_bounds = array<i64: 2, 8, 128>}, {transform_indices = @transform_1, window_bounds = array<i64: 320>}, {transform_indices = @transform_2, window_bounds = array<i64: 40>}, {transform_indices = @transform_3, window_bounds = array<i64: 1, 8, 128>}]} {
    %c0 = arith.constant 0 : index
    %0 = memref.load %arg2[%c0] : memref<320xf32, #tpu.memory_space<smem>>
    %c1 = arith.constant 1 : index
    %1 = memref.load %arg2[%c1] : memref<320xf32, #tpu.memory_space<smem>>
    %c8 = arith.constant 8 : index
    %2 = memref.load %arg2[%c8] : memref<320xf32, #tpu.memory_space<smem>>
    %c9 = arith.constant 9 : index
    %3 = memref.load %arg2[%c9] : memref<320xf32, #tpu.memory_space<smem>>
    %c16 = arith.constant 16 : index
    %4 = memref.load %arg2[%c16] : memref<320xf32, #tpu.memory_space<smem>>
    %c17 = arith.constant 17 : index
    %5 = memref.load %arg2[%c17] : memref<320xf32, #tpu.memory_space<smem>>
    %c24 = arith.constant 24 : index
    %6 = memref.load %arg2[%c24] : memref<320xf32, #tpu.memory_space<smem>>
    %c25 = arith.constant 25 : index
    %7 = memref.load %arg2[%c25] : memref<320xf32, #tpu.memory_space<smem>>
    %c32 = arith.constant 32 : index
    %8 = memref.load %arg2[%c32] : memref<320xf32, #tpu.memory_space<smem>>
    %c33 = arith.constant 33 : index
    %9 = memref.load %arg2[%c33] : memref<320xf32, #tpu.memory_space<smem>>
    %c0_0 = arith.constant 0 : index
    %10 = memref.load %arg3[%c0_0] : memref<40xf32, #tpu.memory_space<smem>>
    %c1_1 = arith.constant 1 : index
    %11 = memref.load %arg3[%c1_1] : memref<40xf32, #tpu.memory_space<smem>>
    %c2 = arith.constant 2 : index
    %12 = memref.load %arg3[%c2] : memref<40xf32, #tpu.memory_space<smem>>
    %c3 = arith.constant 3 : index
    %13 = memref.load %arg3[%c3] : memref<40xf32, #tpu.memory_space<smem>>
    %c4 = arith.constant 4 : index
    %14 = memref.load %arg3[%c4] : memref<40xf32, #tpu.memory_space<smem>>
    %c64 = arith.constant 64 : index
    %15 = memref.load %arg2[%c64] : memref<320xf32, #tpu.memory_space<smem>>
    %c65 = arith.constant 65 : index
    %16 = memref.load %arg2[%c65] : memref<320xf32, #tpu.memory_space<smem>>
    %c66 = arith.constant 66 : index
    %17 = memref.load %arg2[%c66] : memref<320xf32, #tpu.memory_space<smem>>
    %c67 = arith.constant 67 : index
    %18 = memref.load %arg2[%c67] : memref<320xf32, #tpu.memory_space<smem>>
    %c68 = arith.constant 68 : index
    %19 = memref.load %arg2[%c68] : memref<320xf32, #tpu.memory_space<smem>>
    %c72 = arith.constant 72 : index
    %20 = memref.load %arg2[%c72] : memref<320xf32, #tpu.memory_space<smem>>
    %c73 = arith.constant 73 : index
    %21 = memref.load %arg2[%c73] : memref<320xf32, #tpu.memory_space<smem>>
    %c74 = arith.constant 74 : index
    %22 = memref.load %arg2[%c74] : memref<320xf32, #tpu.memory_space<smem>>
    %c75 = arith.constant 75 : index
    %23 = memref.load %arg2[%c75] : memref<320xf32, #tpu.memory_space<smem>>
    %c76 = arith.constant 76 : index
    %24 = memref.load %arg2[%c76] : memref<320xf32, #tpu.memory_space<smem>>
    %c80 = arith.constant 80 : index
    %25 = memref.load %arg2[%c80] : memref<320xf32, #tpu.memory_space<smem>>
    %c81 = arith.constant 81 : index
    %26 = memref.load %arg2[%c81] : memref<320xf32, #tpu.memory_space<smem>>
    %c82 = arith.constant 82 : index
    %27 = memref.load %arg2[%c82] : memref<320xf32, #tpu.memory_space<smem>>
    %c83 = arith.constant 83 : index
    %28 = memref.load %arg2[%c83] : memref<320xf32, #tpu.memory_space<smem>>
    %c84 = arith.constant 84 : index
    %29 = memref.load %arg2[%c84] : memref<320xf32, #tpu.memory_space<smem>>
    %c88 = arith.constant 88 : index
    %30 = memref.load %arg2[%c88] : memref<320xf32, #tpu.memory_space<smem>>
    %c89 = arith.constant 89 : index
    %31 = memref.load %arg2[%c89] : memref<320xf32, #tpu.memory_space<smem>>
    %c90 = arith.constant 90 : index
    %32 = memref.load %arg2[%c90] : memref<320xf32, #tpu.memory_space<smem>>
    %c91 = arith.constant 91 : index
    %33 = memref.load %arg2[%c91] : memref<320xf32, #tpu.memory_space<smem>>
    %c92 = arith.constant 92 : index
    %34 = memref.load %arg2[%c92] : memref<320xf32, #tpu.memory_space<smem>>
    %c96 = arith.constant 96 : index
    %35 = memref.load %arg2[%c96] : memref<320xf32, #tpu.memory_space<smem>>
    %c97 = arith.constant 97 : index
    %36 = memref.load %arg2[%c97] : memref<320xf32, #tpu.memory_space<smem>>
    %c98 = arith.constant 98 : index
    %37 = memref.load %arg2[%c98] : memref<320xf32, #tpu.memory_space<smem>>
    %c99 = arith.constant 99 : index
    %38 = memref.load %arg2[%c99] : memref<320xf32, #tpu.memory_space<smem>>
    %c100 = arith.constant 100 : index
    %39 = memref.load %arg2[%c100] : memref<320xf32, #tpu.memory_space<smem>>
    %c8_2 = arith.constant 8 : index
    %40 = memref.load %arg3[%c8_2] : memref<40xf32, #tpu.memory_space<smem>>
    %c9_3 = arith.constant 9 : index
    %41 = memref.load %arg3[%c9_3] : memref<40xf32, #tpu.memory_space<smem>>
    %c10 = arith.constant 10 : index
    %42 = memref.load %arg3[%c10] : memref<40xf32, #tpu.memory_space<smem>>
    %c11 = arith.constant 11 : index
    %43 = memref.load %arg3[%c11] : memref<40xf32, #tpu.memory_space<smem>>
    %c12 = arith.constant 12 : index
    %44 = memref.load %arg3[%c12] : memref<40xf32, #tpu.memory_space<smem>>
    %c128 = arith.constant 128 : index
    %45 = memref.load %arg2[%c128] : memref<320xf32, #tpu.memory_space<smem>>
    %c129 = arith.constant 129 : index
    %46 = memref.load %arg2[%c129] : memref<320xf32, #tpu.memory_space<smem>>
    %c130 = arith.constant 130 : index
    %47 = memref.load %arg2[%c130] : memref<320xf32, #tpu.memory_space<smem>>
    %c131 = arith.constant 131 : index
    %48 = memref.load %arg2[%c131] : memref<320xf32, #tpu.memory_space<smem>>
    %c132 = arith.constant 132 : index
    %49 = memref.load %arg2[%c132] : memref<320xf32, #tpu.memory_space<smem>>
    %c136 = arith.constant 136 : index
    %50 = memref.load %arg2[%c136] : memref<320xf32, #tpu.memory_space<smem>>
    %c137 = arith.constant 137 : index
    %51 = memref.load %arg2[%c137] : memref<320xf32, #tpu.memory_space<smem>>
    %c138 = arith.constant 138 : index
    %52 = memref.load %arg2[%c138] : memref<320xf32, #tpu.memory_space<smem>>
    %c139 = arith.constant 139 : index
    %53 = memref.load %arg2[%c139] : memref<320xf32, #tpu.memory_space<smem>>
    %c140 = arith.constant 140 : index
    %54 = memref.load %arg2[%c140] : memref<320xf32, #tpu.memory_space<smem>>
    %c144 = arith.constant 144 : index
    %55 = memref.load %arg2[%c144] : memref<320xf32, #tpu.memory_space<smem>>
    %c145 = arith.constant 145 : index
    %56 = memref.load %arg2[%c145] : memref<320xf32, #tpu.memory_space<smem>>
    %c146 = arith.constant 146 : index
    %57 = memref.load %arg2[%c146] : memref<320xf32, #tpu.memory_space<smem>>
    %c147 = arith.constant 147 : index
    %58 = memref.load %arg2[%c147] : memref<320xf32, #tpu.memory_space<smem>>
    %c148 = arith.constant 148 : index
    %59 = memref.load %arg2[%c148] : memref<320xf32, #tpu.memory_space<smem>>
    %c152 = arith.constant 152 : index
    %60 = memref.load %arg2[%c152] : memref<320xf32, #tpu.memory_space<smem>>
    %c153 = arith.constant 153 : index
    %61 = memref.load %arg2[%c153] : memref<320xf32, #tpu.memory_space<smem>>
    %c154 = arith.constant 154 : index
    %62 = memref.load %arg2[%c154] : memref<320xf32, #tpu.memory_space<smem>>
    %c155 = arith.constant 155 : index
    %63 = memref.load %arg2[%c155] : memref<320xf32, #tpu.memory_space<smem>>
    %c156 = arith.constant 156 : index
    %64 = memref.load %arg2[%c156] : memref<320xf32, #tpu.memory_space<smem>>
    %c160 = arith.constant 160 : index
    %65 = memref.load %arg2[%c160] : memref<320xf32, #tpu.memory_space<smem>>
    %c161 = arith.constant 161 : index
    %66 = memref.load %arg2[%c161] : memref<320xf32, #tpu.memory_space<smem>>
    %c162 = arith.constant 162 : index
    %67 = memref.load %arg2[%c162] : memref<320xf32, #tpu.memory_space<smem>>
    %c163 = arith.constant 163 : index
    %68 = memref.load %arg2[%c163] : memref<320xf32, #tpu.memory_space<smem>>
    %c164 = arith.constant 164 : index
    %69 = memref.load %arg2[%c164] : memref<320xf32, #tpu.memory_space<smem>>
    %c16_4 = arith.constant 16 : index
    %70 = memref.load %arg3[%c16_4] : memref<40xf32, #tpu.memory_space<smem>>
    %c17_5 = arith.constant 17 : index
    %71 = memref.load %arg3[%c17_5] : memref<40xf32, #tpu.memory_space<smem>>
    %c18 = arith.constant 18 : index
    %72 = memref.load %arg3[%c18] : memref<40xf32, #tpu.memory_space<smem>>
    %c19 = arith.constant 19 : index
    %73 = memref.load %arg3[%c19] : memref<40xf32, #tpu.memory_space<smem>>
    %c20 = arith.constant 20 : index
    %74 = memref.load %arg3[%c20] : memref<40xf32, #tpu.memory_space<smem>>
    %c192 = arith.constant 192 : index
    %75 = memref.load %arg2[%c192] : memref<320xf32, #tpu.memory_space<smem>>
    %c193 = arith.constant 193 : index
    %76 = memref.load %arg2[%c193] : memref<320xf32, #tpu.memory_space<smem>>
    %c194 = arith.constant 194 : index
    %77 = memref.load %arg2[%c194] : memref<320xf32, #tpu.memory_space<smem>>
    %c195 = arith.constant 195 : index
    %78 = memref.load %arg2[%c195] : memref<320xf32, #tpu.memory_space<smem>>
    %c196 = arith.constant 196 : index
    %79 = memref.load %arg2[%c196] : memref<320xf32, #tpu.memory_space<smem>>
    %c200 = arith.constant 200 : index
    %80 = memref.load %arg2[%c200] : memref<320xf32, #tpu.memory_space<smem>>
    %c201 = arith.constant 201 : index
    %81 = memref.load %arg2[%c201] : memref<320xf32, #tpu.memory_space<smem>>
    %c202 = arith.constant 202 : index
    %82 = memref.load %arg2[%c202] : memref<320xf32, #tpu.memory_space<smem>>
    %c203 = arith.constant 203 : index
    %83 = memref.load %arg2[%c203] : memref<320xf32, #tpu.memory_space<smem>>
    %c204 = arith.constant 204 : index
    %84 = memref.load %arg2[%c204] : memref<320xf32, #tpu.memory_space<smem>>
    %c208 = arith.constant 208 : index
    %85 = memref.load %arg2[%c208] : memref<320xf32, #tpu.memory_space<smem>>
    %c209 = arith.constant 209 : index
    %86 = memref.load %arg2[%c209] : memref<320xf32, #tpu.memory_space<smem>>
    %c210 = arith.constant 210 : index
    %87 = memref.load %arg2[%c210] : memref<320xf32, #tpu.memory_space<smem>>
    %c211 = arith.constant 211 : index
    %88 = memref.load %arg2[%c211] : memref<320xf32, #tpu.memory_space<smem>>
    %c212 = arith.constant 212 : index
    %89 = memref.load %arg2[%c212] : memref<320xf32, #tpu.memory_space<smem>>
    %c216 = arith.constant 216 : index
    %90 = memref.load %arg2[%c216] : memref<320xf32, #tpu.memory_space<smem>>
    %c217 = arith.constant 217 : index
    %91 = memref.load %arg2[%c217] : memref<320xf32, #tpu.memory_space<smem>>
    %c218 = arith.constant 218 : index
    %92 = memref.load %arg2[%c218] : memref<320xf32, #tpu.memory_space<smem>>
    %c219 = arith.constant 219 : index
    %93 = memref.load %arg2[%c219] : memref<320xf32, #tpu.memory_space<smem>>
    %c220 = arith.constant 220 : index
    %94 = memref.load %arg2[%c220] : memref<320xf32, #tpu.memory_space<smem>>
    %c224 = arith.constant 224 : index
    %95 = memref.load %arg2[%c224] : memref<320xf32, #tpu.memory_space<smem>>
    %c225 = arith.constant 225 : index
    %96 = memref.load %arg2[%c225] : memref<320xf32, #tpu.memory_space<smem>>
    %c226 = arith.constant 226 : index
    %97 = memref.load %arg2[%c226] : memref<320xf32, #tpu.memory_space<smem>>
    %c227 = arith.constant 227 : index
    %98 = memref.load %arg2[%c227] : memref<320xf32, #tpu.memory_space<smem>>
    %c228 = arith.constant 228 : index
    %99 = memref.load %arg2[%c228] : memref<320xf32, #tpu.memory_space<smem>>
    %c24_6 = arith.constant 24 : index
    %100 = memref.load %arg3[%c24_6] : memref<40xf32, #tpu.memory_space<smem>>
    %c25_7 = arith.constant 25 : index
    %101 = memref.load %arg3[%c25_7] : memref<40xf32, #tpu.memory_space<smem>>
    %c26 = arith.constant 26 : index
    %102 = memref.load %arg3[%c26] : memref<40xf32, #tpu.memory_space<smem>>
    %c27 = arith.constant 27 : index
    %103 = memref.load %arg3[%c27] : memref<40xf32, #tpu.memory_space<smem>>
    %c28 = arith.constant 28 : index
    %104 = memref.load %arg3[%c28] : memref<40xf32, #tpu.memory_space<smem>>
    %c256 = arith.constant 256 : index
    %105 = memref.load %arg2[%c256] : memref<320xf32, #tpu.memory_space<smem>>
    %c257 = arith.constant 257 : index
    %106 = memref.load %arg2[%c257] : memref<320xf32, #tpu.memory_space<smem>>
    %c258 = arith.constant 258 : index
    %107 = memref.load %arg2[%c258] : memref<320xf32, #tpu.memory_space<smem>>
    %c259 = arith.constant 259 : index
    %108 = memref.load %arg2[%c259] : memref<320xf32, #tpu.memory_space<smem>>
    %c260 = arith.constant 260 : index
    %109 = memref.load %arg2[%c260] : memref<320xf32, #tpu.memory_space<smem>>
    %c32_8 = arith.constant 32 : index
    %110 = memref.load %arg3[%c32_8] : memref<40xf32, #tpu.memory_space<smem>>
    %c0_9 = arith.constant 0 : index
    %c0_10 = arith.constant 0 : index
    %c0_11 = arith.constant 0 : index
    %111 = vector.load %arg1[%c0_9, %c0_10, %c0_11] : memref<2x8x128xf32, #tpu.memory_space<vmem>>, vector<1x8x128xf32>
    %112 = vector.shape_cast %111 : vector<1x8x128xf32> to vector<8x128xf32>
    %c1_12 = arith.constant 1 : index
    %c0_13 = arith.constant 0 : index
    %c0_14 = arith.constant 0 : index
    %113 = vector.load %arg1[%c1_12, %c0_13, %c0_14] : memref<2x8x128xf32, #tpu.memory_space<vmem>>, vector<1x8x128xf32>
    %114 = vector.shape_cast %113 : vector<1x8x128xf32> to vector<8x128xf32>
    %115 = vector.broadcast %0 : f32 to vector<8x128xf32>
    %116 = arith.mulf %112, %115 : vector<8x128xf32>
    %117 = vector.broadcast %1 : f32 to vector<8x128xf32>
    %118 = arith.mulf %114, %117 : vector<8x128xf32>
    %119 = arith.addf %116, %118 : vector<8x128xf32>
    %120 = vector.broadcast %10 : f32 to vector<8x128xf32>
    %121 = arith.addf %119, %120 : vector<8x128xf32>
    %122 = math.tanh %121 : vector<8x128xf32>
    %123 = vector.broadcast %2 : f32 to vector<8x128xf32>
    %124 = arith.mulf %112, %123 : vector<8x128xf32>
    %125 = vector.broadcast %3 : f32 to vector<8x128xf32>
    %126 = arith.mulf %114, %125 : vector<8x128xf32>
    %127 = arith.addf %124, %126 : vector<8x128xf32>
    %128 = vector.broadcast %11 : f32 to vector<8x128xf32>
    %129 = arith.addf %127, %128 : vector<8x128xf32>
    %130 = math.tanh %129 : vector<8x128xf32>
    %131 = vector.broadcast %4 : f32 to vector<8x128xf32>
    %132 = arith.mulf %112, %131 : vector<8x128xf32>
    %133 = vector.broadcast %5 : f32 to vector<8x128xf32>
    %134 = arith.mulf %114, %133 : vector<8x128xf32>
    %135 = arith.addf %132, %134 : vector<8x128xf32>
    %136 = vector.broadcast %12 : f32 to vector<8x128xf32>
    %137 = arith.addf %135, %136 : vector<8x128xf32>
    %138 = math.tanh %137 : vector<8x128xf32>
    %139 = vector.broadcast %6 : f32 to vector<8x128xf32>
    %140 = arith.mulf %112, %139 : vector<8x128xf32>
    %141 = vector.broadcast %7 : f32 to vector<8x128xf32>
    %142 = arith.mulf %114, %141 : vector<8x128xf32>
    %143 = arith.addf %140, %142 : vector<8x128xf32>
    %144 = vector.broadcast %13 : f32 to vector<8x128xf32>
    %145 = arith.addf %143, %144 : vector<8x128xf32>
    %146 = math.tanh %145 : vector<8x128xf32>
    %147 = vector.broadcast %8 : f32 to vector<8x128xf32>
    %148 = arith.mulf %112, %147 : vector<8x128xf32>
    %149 = vector.broadcast %9 : f32 to vector<8x128xf32>
    %150 = arith.mulf %114, %149 : vector<8x128xf32>
    %151 = arith.addf %148, %150 : vector<8x128xf32>
    %152 = vector.broadcast %14 : f32 to vector<8x128xf32>
    %153 = arith.addf %151, %152 : vector<8x128xf32>
    %154 = math.tanh %153 : vector<8x128xf32>
    %155 = vector.broadcast %15 : f32 to vector<8x128xf32>
    %156 = arith.mulf %122, %155 : vector<8x128xf32>
    %157 = vector.broadcast %16 : f32 to vector<8x128xf32>
    %158 = arith.mulf %130, %157 : vector<8x128xf32>
    %159 = arith.addf %156, %158 : vector<8x128xf32>
    %160 = vector.broadcast %17 : f32 to vector<8x128xf32>
    %161 = arith.mulf %138, %160 : vector<8x128xf32>
    %162 = arith.addf %159, %161 : vector<8x128xf32>
    %163 = vector.broadcast %18 : f32 to vector<8x128xf32>
    %164 = arith.mulf %146, %163 : vector<8x128xf32>
    %165 = arith.addf %162, %164 : vector<8x128xf32>
    %166 = vector.broadcast %19 : f32 to vector<8x128xf32>
    %167 = arith.mulf %154, %166 : vector<8x128xf32>
    %168 = arith.addf %165, %167 : vector<8x128xf32>
    %169 = vector.broadcast %40 : f32 to vector<8x128xf32>
    %170 = arith.addf %168, %169 : vector<8x128xf32>
    %171 = math.tanh %170 : vector<8x128xf32>
    %172 = vector.broadcast %20 : f32 to vector<8x128xf32>
    %173 = arith.mulf %122, %172 : vector<8x128xf32>
    %174 = vector.broadcast %21 : f32 to vector<8x128xf32>
    %175 = arith.mulf %130, %174 : vector<8x128xf32>
    %176 = arith.addf %173, %175 : vector<8x128xf32>
    %177 = vector.broadcast %22 : f32 to vector<8x128xf32>
    %178 = arith.mulf %138, %177 : vector<8x128xf32>
    %179 = arith.addf %176, %178 : vector<8x128xf32>
    %180 = vector.broadcast %23 : f32 to vector<8x128xf32>
    %181 = arith.mulf %146, %180 : vector<8x128xf32>
    %182 = arith.addf %179, %181 : vector<8x128xf32>
    %183 = vector.broadcast %24 : f32 to vector<8x128xf32>
    %184 = arith.mulf %154, %183 : vector<8x128xf32>
    %185 = arith.addf %182, %184 : vector<8x128xf32>
    %186 = vector.broadcast %41 : f32 to vector<8x128xf32>
    %187 = arith.addf %185, %186 : vector<8x128xf32>
    %188 = math.tanh %187 : vector<8x128xf32>
    %189 = vector.broadcast %25 : f32 to vector<8x128xf32>
    %190 = arith.mulf %122, %189 : vector<8x128xf32>
    %191 = vector.broadcast %26 : f32 to vector<8x128xf32>
    %192 = arith.mulf %130, %191 : vector<8x128xf32>
    %193 = arith.addf %190, %192 : vector<8x128xf32>
    %194 = vector.broadcast %27 : f32 to vector<8x128xf32>
    %195 = arith.mulf %138, %194 : vector<8x128xf32>
    %196 = arith.addf %193, %195 : vector<8x128xf32>
    %197 = vector.broadcast %28 : f32 to vector<8x128xf32>
    %198 = arith.mulf %146, %197 : vector<8x128xf32>
    %199 = arith.addf %196, %198 : vector<8x128xf32>
    %200 = vector.broadcast %29 : f32 to vector<8x128xf32>
    %201 = arith.mulf %154, %200 : vector<8x128xf32>
    %202 = arith.addf %199, %201 : vector<8x128xf32>
    %203 = vector.broadcast %42 : f32 to vector<8x128xf32>
    %204 = arith.addf %202, %203 : vector<8x128xf32>
    %205 = math.tanh %204 : vector<8x128xf32>
    %206 = vector.broadcast %30 : f32 to vector<8x128xf32>
    %207 = arith.mulf %122, %206 : vector<8x128xf32>
    %208 = vector.broadcast %31 : f32 to vector<8x128xf32>
    %209 = arith.mulf %130, %208 : vector<8x128xf32>
    %210 = arith.addf %207, %209 : vector<8x128xf32>
    %211 = vector.broadcast %32 : f32 to vector<8x128xf32>
    %212 = arith.mulf %138, %211 : vector<8x128xf32>
    %213 = arith.addf %210, %212 : vector<8x128xf32>
    %214 = vector.broadcast %33 : f32 to vector<8x128xf32>
    %215 = arith.mulf %146, %214 : vector<8x128xf32>
    %216 = arith.addf %213, %215 : vector<8x128xf32>
    %217 = vector.broadcast %34 : f32 to vector<8x128xf32>
    %218 = arith.mulf %154, %217 : vector<8x128xf32>
    %219 = arith.addf %216, %218 : vector<8x128xf32>
    %220 = vector.broadcast %43 : f32 to vector<8x128xf32>
    %221 = arith.addf %219, %220 : vector<8x128xf32>
    %222 = math.tanh %221 : vector<8x128xf32>
    %223 = vector.broadcast %35 : f32 to vector<8x128xf32>
    %224 = arith.mulf %122, %223 : vector<8x128xf32>
    %225 = vector.broadcast %36 : f32 to vector<8x128xf32>
    %226 = arith.mulf %130, %225 : vector<8x128xf32>
    %227 = arith.addf %224, %226 : vector<8x128xf32>
    %228 = vector.broadcast %37 : f32 to vector<8x128xf32>
    %229 = arith.mulf %138, %228 : vector<8x128xf32>
    %230 = arith.addf %227, %229 : vector<8x128xf32>
    %231 = vector.broadcast %38 : f32 to vector<8x128xf32>
    %232 = arith.mulf %146, %231 : vector<8x128xf32>
    %233 = arith.addf %230, %232 : vector<8x128xf32>
    %234 = vector.broadcast %39 : f32 to vector<8x128xf32>
    %235 = arith.mulf %154, %234 : vector<8x128xf32>
    %236 = arith.addf %233, %235 : vector<8x128xf32>
    %237 = vector.broadcast %44 : f32 to vector<8x128xf32>
    %238 = arith.addf %236, %237 : vector<8x128xf32>
    %239 = math.tanh %238 : vector<8x128xf32>
    %240 = vector.broadcast %45 : f32 to vector<8x128xf32>
    %241 = arith.mulf %171, %240 : vector<8x128xf32>
    %242 = vector.broadcast %46 : f32 to vector<8x128xf32>
    %243 = arith.mulf %188, %242 : vector<8x128xf32>
    %244 = arith.addf %241, %243 : vector<8x128xf32>
    %245 = vector.broadcast %47 : f32 to vector<8x128xf32>
    %246 = arith.mulf %205, %245 : vector<8x128xf32>
    %247 = arith.addf %244, %246 : vector<8x128xf32>
    %248 = vector.broadcast %48 : f32 to vector<8x128xf32>
    %249 = arith.mulf %222, %248 : vector<8x128xf32>
    %250 = arith.addf %247, %249 : vector<8x128xf32>
    %251 = vector.broadcast %49 : f32 to vector<8x128xf32>
    %252 = arith.mulf %239, %251 : vector<8x128xf32>
    %253 = arith.addf %250, %252 : vector<8x128xf32>
    %254 = vector.broadcast %70 : f32 to vector<8x128xf32>
    %255 = arith.addf %253, %254 : vector<8x128xf32>
    %256 = math.tanh %255 : vector<8x128xf32>
    %257 = vector.broadcast %50 : f32 to vector<8x128xf32>
    %258 = arith.mulf %171, %257 : vector<8x128xf32>
    %259 = vector.broadcast %51 : f32 to vector<8x128xf32>
    %260 = arith.mulf %188, %259 : vector<8x128xf32>
    %261 = arith.addf %258, %260 : vector<8x128xf32>
    %262 = vector.broadcast %52 : f32 to vector<8x128xf32>
    %263 = arith.mulf %205, %262 : vector<8x128xf32>
    %264 = arith.addf %261, %263 : vector<8x128xf32>
    %265 = vector.broadcast %53 : f32 to vector<8x128xf32>
    %266 = arith.mulf %222, %265 : vector<8x128xf32>
    %267 = arith.addf %264, %266 : vector<8x128xf32>
    %268 = vector.broadcast %54 : f32 to vector<8x128xf32>
    %269 = arith.mulf %239, %268 : vector<8x128xf32>
    %270 = arith.addf %267, %269 : vector<8x128xf32>
    %271 = vector.broadcast %71 : f32 to vector<8x128xf32>
    %272 = arith.addf %270, %271 : vector<8x128xf32>
    %273 = math.tanh %272 : vector<8x128xf32>
    %274 = vector.broadcast %55 : f32 to vector<8x128xf32>
    %275 = arith.mulf %171, %274 : vector<8x128xf32>
    %276 = vector.broadcast %56 : f32 to vector<8x128xf32>
    %277 = arith.mulf %188, %276 : vector<8x128xf32>
    %278 = arith.addf %275, %277 : vector<8x128xf32>
    %279 = vector.broadcast %57 : f32 to vector<8x128xf32>
    %280 = arith.mulf %205, %279 : vector<8x128xf32>
    %281 = arith.addf %278, %280 : vector<8x128xf32>
    %282 = vector.broadcast %58 : f32 to vector<8x128xf32>
    %283 = arith.mulf %222, %282 : vector<8x128xf32>
    %284 = arith.addf %281, %283 : vector<8x128xf32>
    %285 = vector.broadcast %59 : f32 to vector<8x128xf32>
    %286 = arith.mulf %239, %285 : vector<8x128xf32>
    %287 = arith.addf %284, %286 : vector<8x128xf32>
    %288 = vector.broadcast %72 : f32 to vector<8x128xf32>
    %289 = arith.addf %287, %288 : vector<8x128xf32>
    %290 = math.tanh %289 : vector<8x128xf32>
    %291 = vector.broadcast %60 : f32 to vector<8x128xf32>
    %292 = arith.mulf %171, %291 : vector<8x128xf32>
    %293 = vector.broadcast %61 : f32 to vector<8x128xf32>
    %294 = arith.mulf %188, %293 : vector<8x128xf32>
    %295 = arith.addf %292, %294 : vector<8x128xf32>
    %296 = vector.broadcast %62 : f32 to vector<8x128xf32>
    %297 = arith.mulf %205, %296 : vector<8x128xf32>
    %298 = arith.addf %295, %297 : vector<8x128xf32>
    %299 = vector.broadcast %63 : f32 to vector<8x128xf32>
    %300 = arith.mulf %222, %299 : vector<8x128xf32>
    %301 = arith.addf %298, %300 : vector<8x128xf32>
    %302 = vector.broadcast %64 : f32 to vector<8x128xf32>
    %303 = arith.mulf %239, %302 : vector<8x128xf32>
    %304 = arith.addf %301, %303 : vector<8x128xf32>
    %305 = vector.broadcast %73 : f32 to vector<8x128xf32>
    %306 = arith.addf %304, %305 : vector<8x128xf32>
    %307 = math.tanh %306 : vector<8x128xf32>
    %308 = vector.broadcast %65 : f32 to vector<8x128xf32>
    %309 = arith.mulf %171, %308 : vector<8x128xf32>
    %310 = vector.broadcast %66 : f32 to vector<8x128xf32>
    %311 = arith.mulf %188, %310 : vector<8x128xf32>
    %312 = arith.addf %309, %311 : vector<8x128xf32>
    %313 = vector.broadcast %67 : f32 to vector<8x128xf32>
    %314 = arith.mulf %205, %313 : vector<8x128xf32>
    %315 = arith.addf %312, %314 : vector<8x128xf32>
    %316 = vector.broadcast %68 : f32 to vector<8x128xf32>
    %317 = arith.mulf %222, %316 : vector<8x128xf32>
    %318 = arith.addf %315, %317 : vector<8x128xf32>
    %319 = vector.broadcast %69 : f32 to vector<8x128xf32>
    %320 = arith.mulf %239, %319 : vector<8x128xf32>
    %321 = arith.addf %318, %320 : vector<8x128xf32>
    %322 = vector.broadcast %74 : f32 to vector<8x128xf32>
    %323 = arith.addf %321, %322 : vector<8x128xf32>
    %324 = math.tanh %323 : vector<8x128xf32>
    %325 = vector.broadcast %75 : f32 to vector<8x128xf32>
    %326 = arith.mulf %256, %325 : vector<8x128xf32>
    %327 = vector.broadcast %76 : f32 to vector<8x128xf32>
    %328 = arith.mulf %273, %327 : vector<8x128xf32>
    %329 = arith.addf %326, %328 : vector<8x128xf32>
    %330 = vector.broadcast %77 : f32 to vector<8x128xf32>
    %331 = arith.mulf %290, %330 : vector<8x128xf32>
    %332 = arith.addf %329, %331 : vector<8x128xf32>
    %333 = vector.broadcast %78 : f32 to vector<8x128xf32>
    %334 = arith.mulf %307, %333 : vector<8x128xf32>
    %335 = arith.addf %332, %334 : vector<8x128xf32>
    %336 = vector.broadcast %79 : f32 to vector<8x128xf32>
    %337 = arith.mulf %324, %336 : vector<8x128xf32>
    %338 = arith.addf %335, %337 : vector<8x128xf32>
    %339 = vector.broadcast %100 : f32 to vector<8x128xf32>
    %340 = arith.addf %338, %339 : vector<8x128xf32>
    %341 = math.tanh %340 : vector<8x128xf32>
    %342 = vector.broadcast %80 : f32 to vector<8x128xf32>
    %343 = arith.mulf %256, %342 : vector<8x128xf32>
    %344 = vector.broadcast %81 : f32 to vector<8x128xf32>
    %345 = arith.mulf %273, %344 : vector<8x128xf32>
    %346 = arith.addf %343, %345 : vector<8x128xf32>
    %347 = vector.broadcast %82 : f32 to vector<8x128xf32>
    %348 = arith.mulf %290, %347 : vector<8x128xf32>
    %349 = arith.addf %346, %348 : vector<8x128xf32>
    %350 = vector.broadcast %83 : f32 to vector<8x128xf32>
    %351 = arith.mulf %307, %350 : vector<8x128xf32>
    %352 = arith.addf %349, %351 : vector<8x128xf32>
    %353 = vector.broadcast %84 : f32 to vector<8x128xf32>
    %354 = arith.mulf %324, %353 : vector<8x128xf32>
    %355 = arith.addf %352, %354 : vector<8x128xf32>
    %356 = vector.broadcast %101 : f32 to vector<8x128xf32>
    %357 = arith.addf %355, %356 : vector<8x128xf32>
    %358 = math.tanh %357 : vector<8x128xf32>
    %359 = vector.broadcast %85 : f32 to vector<8x128xf32>
    %360 = arith.mulf %256, %359 : vector<8x128xf32>
    %361 = vector.broadcast %86 : f32 to vector<8x128xf32>
    %362 = arith.mulf %273, %361 : vector<8x128xf32>
    %363 = arith.addf %360, %362 : vector<8x128xf32>
    %364 = vector.broadcast %87 : f32 to vector<8x128xf32>
    %365 = arith.mulf %290, %364 : vector<8x128xf32>
    %366 = arith.addf %363, %365 : vector<8x128xf32>
    %367 = vector.broadcast %88 : f32 to vector<8x128xf32>
    %368 = arith.mulf %307, %367 : vector<8x128xf32>
    %369 = arith.addf %366, %368 : vector<8x128xf32>
    %370 = vector.broadcast %89 : f32 to vector<8x128xf32>
    %371 = arith.mulf %324, %370 : vector<8x128xf32>
    %372 = arith.addf %369, %371 : vector<8x128xf32>
    %373 = vector.broadcast %102 : f32 to vector<8x128xf32>
    %374 = arith.addf %372, %373 : vector<8x128xf32>
    %375 = math.tanh %374 : vector<8x128xf32>
    %376 = vector.broadcast %90 : f32 to vector<8x128xf32>
    %377 = arith.mulf %256, %376 : vector<8x128xf32>
    %378 = vector.broadcast %91 : f32 to vector<8x128xf32>
    %379 = arith.mulf %273, %378 : vector<8x128xf32>
    %380 = arith.addf %377, %379 : vector<8x128xf32>
    %381 = vector.broadcast %92 : f32 to vector<8x128xf32>
    %382 = arith.mulf %290, %381 : vector<8x128xf32>
    %383 = arith.addf %380, %382 : vector<8x128xf32>
    %384 = vector.broadcast %93 : f32 to vector<8x128xf32>
    %385 = arith.mulf %307, %384 : vector<8x128xf32>
    %386 = arith.addf %383, %385 : vector<8x128xf32>
    %387 = vector.broadcast %94 : f32 to vector<8x128xf32>
    %388 = arith.mulf %324, %387 : vector<8x128xf32>
    %389 = arith.addf %386, %388 : vector<8x128xf32>
    %390 = vector.broadcast %103 : f32 to vector<8x128xf32>
    %391 = arith.addf %389, %390 : vector<8x128xf32>
    %392 = math.tanh %391 : vector<8x128xf32>
    %393 = vector.broadcast %95 : f32 to vector<8x128xf32>
    %394 = arith.mulf %256, %393 : vector<8x128xf32>
    %395 = vector.broadcast %96 : f32 to vector<8x128xf32>
    %396 = arith.mulf %273, %395 : vector<8x128xf32>
    %397 = arith.addf %394, %396 : vector<8x128xf32>
    %398 = vector.broadcast %97 : f32 to vector<8x128xf32>
    %399 = arith.mulf %290, %398 : vector<8x128xf32>
    %400 = arith.addf %397, %399 : vector<8x128xf32>
    %401 = vector.broadcast %98 : f32 to vector<8x128xf32>
    %402 = arith.mulf %307, %401 : vector<8x128xf32>
    %403 = arith.addf %400, %402 : vector<8x128xf32>
    %404 = vector.broadcast %99 : f32 to vector<8x128xf32>
    %405 = arith.mulf %324, %404 : vector<8x128xf32>
    %406 = arith.addf %403, %405 : vector<8x128xf32>
    %407 = vector.broadcast %104 : f32 to vector<8x128xf32>
    %408 = arith.addf %406, %407 : vector<8x128xf32>
    %409 = math.tanh %408 : vector<8x128xf32>
    %410 = vector.broadcast %105 : f32 to vector<8x128xf32>
    %411 = arith.mulf %341, %410 : vector<8x128xf32>
    %412 = vector.broadcast %106 : f32 to vector<8x128xf32>
    %413 = arith.mulf %358, %412 : vector<8x128xf32>
    %414 = arith.addf %411, %413 : vector<8x128xf32>
    %415 = vector.broadcast %107 : f32 to vector<8x128xf32>
    %416 = arith.mulf %375, %415 : vector<8x128xf32>
    %417 = arith.addf %414, %416 : vector<8x128xf32>
    %418 = vector.broadcast %108 : f32 to vector<8x128xf32>
    %419 = arith.mulf %392, %418 : vector<8x128xf32>
    %420 = arith.addf %417, %419 : vector<8x128xf32>
    %421 = vector.broadcast %109 : f32 to vector<8x128xf32>
    %422 = arith.mulf %409, %421 : vector<8x128xf32>
    %423 = arith.addf %420, %422 : vector<8x128xf32>
    %424 = vector.broadcast %110 : f32 to vector<8x128xf32>
    %425 = arith.addf %423, %424 : vector<8x128xf32>
    %c0_15 = arith.constant 0 : index
    %c0_16 = arith.constant 0 : index
    %c0_17 = arith.constant 0 : index
    %426 = vector.load %arg4[%c0_15, %c0_16, %c0_17] : memref<1x8x128xf32, #tpu.memory_space<vmem>>, vector<1x8x128xf32>
    %427 = vector.shape_cast %426 : vector<1x8x128xf32> to vector<8x128xf32>
    %428 = vector.shape_cast %425 : vector<8x128xf32> to vector<1x8x128xf32>
    tpu.vector_store %arg4[%c0_15, %c0_16, %c0_17], %428 {strides = array<i32>} : memref<1x8x128xf32, #tpu.memory_space<vmem>>, vector<1x8x128xf32>,
    return
  }
  func.func @transform_0(%arg0: i32) -> (i32, i32, i32) {
    %c0_i32 = arith.constant 0 : i32
    %c0_i32_0 = arith.constant 0 : i32
    %c0_i32_1 = arith.constant 0 : i32
    return %c0_i32, %arg0, %c0_i32_0 : i32, i32, i32
  }
  func.func @transform_1(%arg0: i32) -> i32 {
    %c0_i32 = arith.constant 0 : i32
    %c0_i32_0 = arith.constant 0 : i32
    return %c0_i32 : i32
  }
  func.func @transform_2(%arg0: i32) -> i32 {
    %c0_i32 = arith.constant 0 : i32
    %c0_i32_0 = arith.constant 0 : i32
    return %c0_i32 : i32
  }
  func.func @transform_3(%arg0: i32) -> (i32, i32, i32) {
    %c0_i32 = arith.constant 0 : i32
    %c0_i32_0 = arith.constant 0 : i32
    %c0_i32_1 = arith.constant 0 : i32
    return %c0_i32, %arg0, %c0_i32_0 : i32, i32, i32
  }
}

</mosaic_0001>

<llo_original>
// kernel: diffusion_nn_forward.1
$region0: #{diffusion_nn_forward.1}
  #allocation0 [shape = 'u32[]', space=smem, size = 0x4, offset = 0x4, fixed_abs, tag = 'smem constant byte address 0x4 - core index']
  #allocation1 [shape = 'u32[144,128]{1,0:T(1,128)}', space=vmem, size = 0x12000, scoped, tag = 'internal scratch']
  %s0 = inlined_call_operand.vmem [shape: f32[2,8,128], index: 0, kind: input, shape index: {}]
  %s1 = inlined_call_operand.vmem [shape: f32[320], index: 1, kind: input, shape index: {}]
  %s2 = inlined_call_operand.vmem [shape: f32[40], index: 2, kind: input, shape index: {}]
  %s3 = inlined_call_operand.vmem [shape: f32[1,8,128], index: 3, kind: output, shape index: {}]
  %s4 = sld [smem:[#allocation0]]
  $region30: #{diffusion_nn_forward.1} parent=0
    _
  %s6 = ssub.s32 1, %s4
  %s7 = scalar_select 0, %s6, %s4
  $region1: #{diffusion_nn_forward.1} parent=0
    #allocation2 [shape = 'u8[1536]{0}', space=smem, size = 0x600, scoped, tag = 'input window, operand 1, single buffered']
    #allocation3 [shape = 's32[1]{0}', space=sflag, size = 0x4, scoped, tag = 'scoped memory for diffusion_nn_forward.1']
    #allocation4 [shape = 'u8[512]{0}', space=smem, size = 0x200, scoped, tag = 'input window, operand 2, single buffered']
    #allocation5 [shape = 's32[1]{0}', space=sflag, size = 0x4, scoped, tag = 'scoped memory for diffusion_nn_forward.1']
    %8 = vsyncpa [#allocation3], 0
    %9 = vsyncpa [#allocation5], 0
    // Predicated region
    $region2: #{diffusion_nn_forward.1} parent=1 // pred_check
      _
    $region3: #{diffusion_nn_forward.1} parent=1 // pred_check_branch
      %11 = sbr.rel (0) target = $region5
    $region4: #{diffusion_nn_forward.1} parent=1 // pred_region
      _
    $region5: #{diffusion_nn_forward.1} parent=1 // pred_fallthru
      _
    // Predicated region
    $region6: #{diffusion_nn_forward.1} parent=1 // pred_check
      _
    $region7: #{diffusion_nn_forward.1} parent=1 // pred_check_branch
      %13 = sbr.rel (0) target = $region9
    $region8: #{diffusion_nn_forward.1} parent=1 // pred_region
      %s15 = ssub.s32 48, 48
      %16 = vsyncadd [#allocation3], %s15
      %s18 = sshll.u32 %s1, 4
      %s19 = int_to_ptr.vmem [resolvable:$true] %s18
      %21 = dma.vmem_to_smem %s19, 48, [#allocation2], [#allocation3]
    $region9: #{diffusion_nn_forward.1} parent=1 // pred_fallthru
      _
    // Predicated region
    $region10: #{diffusion_nn_forward.1} parent=1 // pred_check
      _
    $region11: #{diffusion_nn_forward.1} parent=1 // pred_check_branch
      %23 = sbr.rel (0) target = $region13
    $region12: #{diffusion_nn_forward.1} parent=1 // pred_region
      %s25 = ssub.s32 16, 16
      %26 = vsyncadd [#allocation5], %s25
      %s28 = sshll.u32 %s2, 4
      %s29 = int_to_ptr.vmem [resolvable:$true] %s28
      %31 = dma.vmem_to_smem %s29, 16, [#allocation4], [#allocation5]
    $region13: #{diffusion_nn_forward.1} parent=1 // pred_fallthru
      _
    // Predicated region
    $region14: #{diffusion_nn_forward.1} parent=1 // pred_check
      _
    $region15: #{diffusion_nn_forward.1} parent=1 // pred_check_branch
      %33 = sbr.rel (0) target = $region17
    $region16: #{diffusion_nn_forward.1} parent=1 // pred_region
      %34 = dma.done [#allocation3], 48
    $region17: #{diffusion_nn_forward.1} parent=1 // pred_fallthru
      _
    // Predicated region
    $region18: #{diffusion_nn_forward.1} parent=1 // pred_check
      _
    $region19: #{diffusion_nn_forward.1} parent=1 // pred_check_branch
      %36 = sbr.rel (0) target = $region21
    $region20: #{diffusion_nn_forward.1} parent=1 // pred_region
      %37 = dma.done [#allocation5], 16
    $region21: #{diffusion_nn_forward.1} parent=1 // pred_fallthru
      _
    %38 = sfence
    %s39 = sld [smem:[#allocation2]]
    %s40 = sld [smem:[#allocation2 + $0x1]]
    %s41 = sld [smem:[#allocation2 + $0x8]]
    %s42 = sld [smem:[#allocation2 + $0x9]]
    %s43 = sld [smem:[#allocation2 + $0x10]]
    %s44 = sld [smem:[#allocation2 + $0x11]]
    %s45 = sld [smem:[#allocation2 + $0x18]]
    %s46 = sld [smem:[#allocation2 + $0x19]]
    %s47 = sld [smem:[#allocation2 + $0x20]]
    %s48 = sld [smem:[#allocation2 + $0x21]]
    %s49 = sld [smem:[#allocation4]]
    %s50 = sld [smem:[#allocation4 + $0x1]]
    %s51 = sld [smem:[#allocation4 + $0x2]]
    %s52 = sld [smem:[#allocation4 + $0x3]]
    %s53 = sld [smem:[#allocation4 + $0x4]]
    %s54 = sld [smem:[#allocation2 + $0x40]]
    %s55 = sld [smem:[#allocation2 + $0x41]]
    %s56 = sld [smem:[#allocation2 + $0x42]]
    %s57 = sld [smem:[#allocation2 + $0x43]]
    %s58 = sld [smem:[#allocation2 + $0x44]]
    %s59 = sld [smem:[#allocation2 + $0x48]]
    %s60 = sld [smem:[#allocation2 + $0x49]]
    %s61 = sld [smem:[#allocation2 + $0x4a]]
    %s62 = sld [smem:[#allocation2 + $0x4b]]
    %s63 = sld [smem:[#allocation2 + $0x4c]]
    %s64 = sld [smem:[#allocation2 + $0x50]]
    %s65 = sld [smem:[#allocation2 + $0x51]]
    %s66 = sld [smem:[#allocation2 + $0x52]]
    %s67 = sld [smem:[#allocation2 + $0x53]]
    %s68 = sld [smem:[#allocation2 + $0x54]]
    %s69 = sld [smem:[#allocation2 + $0x58]]
    %s70 = sld [smem:[#allocation2 + $0x59]]
    %s71 = sld [smem:[#allocation2 + $0x5a]]
    %s72 = sld [smem:[#allocation2 + $0x5b]]
    %s73 = sld [smem:[#allocation2 + $0x5c]]
    %s74 = sld [smem:[#allocation2 + $0x60]]
    %s75 = sld [smem:[#allocation2 + $0x61]]
    %s76 = sld [smem:[#allocation2 + $0x62]]
    %s77 = sld [smem:[#allocation2 + $0x63]]
    %s78 = sld [smem:[#allocation2 + $0x64]]
    %s79 = sld [smem:[#allocation4 + $0x8]]
    %s80 = sld [smem:[#allocation4 + $0x9]]
    %s81 = sld [smem:[#allocation4 + $0xa]]
    %s82 = sld [smem:[#allocation4 + $0xb]]
    %s83 = sld [smem:[#allocation4 + $0xc]]
    %s84 = sld [smem:[#allocation2 + $0x80]]
    %s85 = sld [smem:[#allocation2 + $0x81]]
    %s86 = sld [smem:[#allocation2 + $0x82]]
    %s87 = sld [smem:[#allocation2 + $0x83]]
    %s88 = sld [smem:[#allocation2 + $0x84]]
    %s89 = sld [smem:[#allocation2 + $0x88]]
    %s90 = sld [smem:[#allocation2 + $0x89]]
    %s91 = sld [smem:[#allocation2 + $0x8a]]
    %s92 = sld [smem:[#allocation2 + $0x8b]]
    %s93 = sld [smem:[#allocation2 + $0x8c]]
    %s94 = sld [smem:[#allocation2 + $0x90]]
    %s95 = sld [smem:[#allocation2 + $0x91]]
    %s96 = sld [smem:[#allocation2 + $0x92]]
    %s97 = sld [smem:[#allocation2 + $0x93]]
    %s98 = sld [smem:[#allocation2 + $0x94]]
    %s99 = sld [smem:[#allocation2 + $0x98]]
    %s100 = sld [smem:[#allocation2 + $0x99]]
    %s101 = sld [smem:[#allocation2 + $0x9a]]
    %s102 = sld [smem:[#allocation2 + $0x9b]]
    %s103 = sld [smem:[#allocation2 + $0x9c]]
    %s104 = sld [smem:[#allocation2 + $0xa0]]
    %s105 = sld [smem:[#allocation2 + $0xa1]]
    %s106 = sld [smem:[#allocation2 + $0xa2]]
    %s107 = sld [smem:[#allocation2 + $0xa3]]
    %s108 = sld [smem:[#allocation2 + $0xa4]]
    %s109 = sld [smem:[#allocation4 + $0x10]]
    %s110 = sld [smem:[#allocation4 + $0x11]]
    %s111 = sld [smem:[#allocation4 + $0x12]]
    %s112 = sld [smem:[#allocation4 + $0x13]]
    %s113 = sld [smem:[#allocation4 + $0x14]]
    %s114 = sld [smem:[#allocation2 + $0xc0]]
    %s115 = sld [smem:[#allocation2 + $0xc1]]
    %s116 = sld [smem:[#allocation2 + $0xc2]]
    %s117 = sld [smem:[#allocation2 + $0xc3]]
    %s118 = sld [smem:[#allocation2 + $0xc4]]
    %s119 = sld [smem:[#allocation2 + $0xc8]]
    %s120 = sld [smem:[#allocation2 + $0xc9]]
    %s121 = sld [smem:[#allocation2 + $0xca]]
    %s122 = sld [smem:[#allocation2 + $0xcb]]
    %s123 = sld [smem:[#allocation2 + $0xcc]]
    %s124 = sld [smem:[#allocation2 + $0xd0]]
    %s125 = sld [smem:[#allocation2 + $0xd1]]
    %s126 = sld [smem:[#allocation2 + $0xd2]]
    %s127 = sld [smem:[#allocation2 + $0xd3]]
    %s128 = sld [smem:[#allocation2 + $0xd4]]
    %s129 = sld [smem:[#allocation2 + $0xd8]]
    %s130 = sld [smem:[#allocation2 + $0xd9]]
    %s131 = sld [smem:[#allocation2 + $0xda]]
    %s132 = sld [smem:[#allocation2 + $0xdb]]
    %s133 = sld [smem:[#allocation2 + $0xdc]]
    %s134 = sld [smem:[#allocation2 + $0xe0]]
    %s135 = sld [smem:[#allocation2 + $0xe1]]
    %s136 = sld [smem:[#allocation2 + $0xe2]]
    %s137 = sld [smem:[#allocation2 + $0xe3]]
    %s138 = sld [smem:[#allocation2 + $0xe4]]
    %s139 = sld [smem:[#allocation4 + $0x18]]
    %s140 = sld [smem:[#allocation4 + $0x19]]
    %s141 = sld [smem:[#allocation4 + $0x1a]]
    %s142 = sld [smem:[#allocation4 + $0x1b]]
    %s143 = sld [smem:[#allocation4 + $0x1c]]
    %s144 = sld [smem:[#allocation2 + $0x100]]
    %s145 = sld [smem:[#allocation2 + $0x101]]
    %s146 = sld [smem:[#allocation2 + $0x102]]
    %s147 = sld [smem:[#allocation2 + $0x103]]
    %s148 = sld [smem:[#allocation2 + $0x104]]
    %s149 = sld [smem:[#allocation4 + $0x20]]
    %v150 = vld [vmem:[%s0] sm:$0xff]
    %s151 = scalar_lea.vmem %s0, 8
    %v152 = vld [vmem:[%s151] sm:$0xff]
    %v153 = vstv %s39
    %v154 = vmul.f32 %v150, %v153
    %v155 = vstv %s40
    %v156 = vmul.f32 %v152, %v155
    %v157 = vadd.f32 %v154, %v156
    %v158 = vstv %s49
    %v159 = vadd.f32 %v157, %v158
    %v160 = vtanh.pop %v159
    %v161 = vstv %s41
    %v162 = vmul.f32 %v150, %v161
    %v163 = vstv %s42
    %v164 = vmul.f32 %v152, %v163
    %v165 = vadd.f32 %v162, %v164
    %v166 = vstv %s50
    %v167 = vadd.f32 %v165, %v166
    %v168 = vtanh.pop %v167
    %v169 = vstv %s43
    %v170 = vmul.f32 %v150, %v169
    %v171 = vstv %s44
    %v172 = vmul.f32 %v152, %v171
    %v173 = vadd.f32 %v170, %v172
    %v174 = vstv %s51
    %v175 = vadd.f32 %v173, %v174
    %v176 = vtanh.pop %v175
    %v177 = vstv %s45
    %v178 = vmul.f32 %v150, %v177
    %v179 = vstv %s46
    %v180 = vmul.f32 %v152, %v179
    %v181 = vadd.f32 %v178, %v180
    %v182 = vstv %s52
    %v183 = vadd.f32 %v181, %v182
    %v184 = vtanh.pop %v183
    %v185 = vstv %s47
    %v186 = vmul.f32 %v150, %v185
    %v187 = vstv %s48
    %v188 = vmul.f32 %v152, %v187
    %v189 = vadd.f32 %v186, %v188
    %v190 = vstv %s53
    %v191 = vadd.f32 %v189, %v190
    %v192 = vtanh.pop %v191
    %v193 = vstv %s54
    %v194 = vmul.f32 %v160, %v193
    %v195 = vstv %s55
    %v196 = vmul.f32 %v168, %v195
    %v197 = vadd.f32 %v194, %v196
    %v198 = vstv %s56
    %v199 = vmul.f32 %v176, %v198
    %v200 = vadd.f32 %v197, %v199
    %v201 = vstv %s57
    %v202 = vmul.f32 %v184, %v201
    %v203 = vadd.f32 %v200, %v202
    %v204 = vstv %s58
    %v205 = vmul.f32 %v192, %v204
    %v206 = vadd.f32 %v203, %v205
    %v207 = vstv %s79
    %v208 = vadd.f32 %v206, %v207
    %v209 = vtanh.pop %v208
    %v210 = vstv %s59
    %v211 = vmul.f32 %v160, %v210
    %v212 = vstv %s60
    %v213 = vmul.f32 %v168, %v212
    %v214 = vadd.f32 %v211, %v213
    %v215 = vstv %s61
    %v216 = vmul.f32 %v176, %v215
    %v217 = vadd.f32 %v214, %v216
    %v218 = vstv %s62
    %v219 = vmul.f32 %v184, %v218
    %v220 = vadd.f32 %v217, %v219
    %v221 = vstv %s63
    %v222 = vmul.f32 %v192, %v221
    %v223 = vadd.f32 %v220, %v222
    %v224 = vstv %s80
    %v225 = vadd.f32 %v223, %v224
    %v226 = vtanh.pop %v225
    %v227 = vstv %s64
    %v228 = vmul.f32 %v160, %v227
    %v229 = vstv %s65
    %v230 = vmul.f32 %v168, %v229
    %v231 = vadd.f32 %v228, %v230
    %v232 = vstv %s66
    %v233 = vmul.f32 %v176, %v232
    %v234 = vadd.f32 %v231, %v233
    %v235 = vstv %s67
    %v236 = vmul.f32 %v184, %v235
    %v237 = vadd.f32 %v234, %v236
    %v238 = vstv %s68
    %v239 = vmul.f32 %v192, %v238
    %v240 = vadd.f32 %v237, %v239
    %v241 = vstv %s81
    %v242 = vadd.f32 %v240, %v241
    %v243 = vtanh.pop %v242
    %v244 = vstv %s69
    %v245 = vmul.f32 %v160, %v244
    %v246 = vstv %s70
    %v247 = vmul.f32 %v168, %v246
    %v248 = vadd.f32 %v245, %v247
    %v249 = vstv %s71
    %v250 = vmul.f32 %v176, %v249
    %v251 = vadd.f32 %v248, %v250
    %v252 = vstv %s72
    %v253 = vmul.f32 %v184, %v252
    %v254 = vadd.f32 %v251, %v253
    %v255 = vstv %s73
    %v256 = vmul.f32 %v192, %v255
    %v257 = vadd.f32 %v254, %v256
    %v258 = vstv %s82
    %v259 = vadd.f32 %v257, %v258
    %v260 = vtanh.pop %v259
    %v261 = vstv %s74
    %v262 = vmul.f32 %v160, %v261
    %v263 = vstv %s75
    %v264 = vmul.f32 %v168, %v263
    %v265 = vadd.f32 %v262, %v264
    %v266 = vstv %s76
    %v267 = vmul.f32 %v176, %v266
    %v268 = vadd.f32 %v265, %v267
    %v269 = vstv %s77
    %v270 = vmul.f32 %v184, %v269
    %v271 = vadd.f32 %v268, %v270
    %v272 = vstv %s78
    %v273 = vmul.f32 %v192, %v272
    %v274 = vadd.f32 %v271, %v273
    %v275 = vstv %s83
    %v276 = vadd.f32 %v274, %v275
    %v277 = vtanh.pop %v276
    %v278 = vstv %s84
    %v279 = vmul.f32 %v209, %v278
    %v280 = vstv %s85
    %v281 = vmul.f32 %v226, %v280
    %v282 = vadd.f32 %v279, %v281
    %v283 = vstv %s86
    %v284 = vmul.f32 %v243, %v283
    %v285 = vadd.f32 %v282, %v284
    %v286 = vstv %s87
    %v287 = vmul.f32 %v260, %v286
    %v288 = vadd.f32 %v285, %v287
    %v289 = vstv %s88
    %v290 = vmul.f32 %v277, %v289
    %v291 = vadd.f32 %v288, %v290
    %v292 = vstv %s109
    %v293 = vadd.f32 %v291, %v292
    %v294 = vtanh.pop %v293
    %v295 = vstv %s89
    %v296 = vmul.f32 %v209, %v295
    %v297 = vstv %s90
    %v298 = vmul.f32 %v226, %v297
    %v299 = vadd.f32 %v296, %v298
    %v300 = vstv %s91
    %v301 = vmul.f32 %v243, %v300
    %v302 = vadd.f32 %v299, %v301
    %v303 = vstv %s92
    %v304 = vmul.f32 %v260, %v303
    %v305 = vadd.f32 %v302, %v304
    %v306 = vstv %s93
    %v307 = vmul.f32 %v277, %v306
    %v308 = vadd.f32 %v305, %v307
    %v309 = vstv %s110
    %v310 = vadd.f32 %v308, %v309
    %v311 = vtanh.pop %v310
    %v312 = vstv %s94
    %v313 = vmul.f32 %v209, %v312
    %v314 = vstv %s95
    %v315 = vmul.f32 %v226, %v314
    %v316 = vadd.f32 %v313, %v315
    %v317 = vstv %s96
    %v318 = vmul.f32 %v243, %v317
    %v319 = vadd.f32 %v316, %v318
    %v320 = vstv %s97
    %v321 = vmul.f32 %v260, %v320
    %v322 = vadd.f32 %v319, %v321
    %v323 = vstv %s98
    %v324 = vmul.f32 %v277, %v323
    %v325 = vadd.f32 %v322, %v324
    %v326 = vstv %s111
    %v327 = vadd.f32 %v325, %v326
    %v328 = vtanh.pop %v327
    %v329 = vstv %s99
    %v330 = vmul.f32 %v209, %v329
    %v331 = vstv %s100
    %v332 = vmul.f32 %v226, %v331
    %v333 = vadd.f32 %v330, %v332
    %v334 = vstv %s101
    %v335 = vmul.f32 %v243, %v334
    %v336 = vadd.f32 %v333, %v335
    %v337 = vstv %s102
    %v338 = vmul.f32 %v260, %v337
    %v339 = vadd.f32 %v336, %v338
    %v340 = vstv %s103
    %v341 = vmul.f32 %v277, %v340
    %v342 = vadd.f32 %v339, %v341
    %v343 = vstv %s112
    %v344 = vadd.f32 %v342, %v343
    %v345 = vtanh.pop %v344
    %v346 = vstv %s104
    %v347 = vmul.f32 %v209, %v346
    %v348 = vstv %s105
    %v349 = vmul.f32 %v226, %v348
    %v350 = vadd.f32 %v347, %v349
    %v351 = vstv %s106
    %v352 = vmul.f32 %v243, %v351
    %v353 = vadd.f32 %v350, %v352
    %v354 = vstv %s107
    %v355 = vmul.f32 %v260, %v354
    %v356 = vadd.f32 %v353, %v355
    %v357 = vstv %s108
    %v358 = vmul.f32 %v277, %v357
    %v359 = vadd.f32 %v356, %v358
    %v360 = vstv %s113
    %v361 = vadd.f32 %v359, %v360
    %v362 = vtanh.pop %v361
    %v363 = vstv %s114
    %v364 = vmul.f32 %v294, %v363
    %v365 = vstv %s115
    %v366 = vmul.f32 %v311, %v365
    %v367 = vadd.f32 %v364, %v366
    %v368 = vstv %s116
    %v369 = vmul.f32 %v328, %v368
    %v370 = vadd.f32 %v367, %v369
    %v371 = vstv %s117
    %v372 = vmul.f32 %v345, %v371
    %v373 = vadd.f32 %v370, %v372
    %v374 = vstv %s118
    %v375 = vmul.f32 %v362, %v374
    %v376 = vadd.f32 %v373, %v375
    %v377 = vstv %s139
    %v378 = vadd.f32 %v376, %v377
    %v379 = vtanh.pop %v378
    %v380 = vstv %s119
    %v381 = vmul.f32 %v294, %v380
    %v382 = vstv %s120
    %v383 = vmul.f32 %v311, %v382
    %v384 = vadd.f32 %v381, %v383
    %v385 = vstv %s121
    %v386 = vmul.f32 %v328, %v385
    %v387 = vadd.f32 %v384, %v386
    %v388 = vstv %s122
    %v389 = vmul.f32 %v345, %v388
    %v390 = vadd.f32 %v387, %v389
    %v391 = vstv %s123
    %v392 = vmul.f32 %v362, %v391
    %v393 = vadd.f32 %v390, %v392
    %v394 = vstv %s140
    %v395 = vadd.f32 %v393, %v394
    %v396 = vtanh.pop %v395
    %v397 = vstv %s124
    %v398 = vmul.f32 %v294, %v397
    %v399 = vstv %s125
    %v400 = vmul.f32 %v311, %v399
    %v401 = vadd.f32 %v398, %v400
    %v402 = vstv %s126
    %v403 = vmul.f32 %v328, %v402
    %v404 = vadd.f32 %v401, %v403
    %v405 = vstv %s127
    %v406 = vmul.f32 %v345, %v405
    %v407 = vadd.f32 %v404, %v406
    %v408 = vstv %s128
    %v409 = vmul.f32 %v362, %v408
    %v410 = vadd.f32 %v407, %v409
    %v411 = vstv %s141
    %v412 = vadd.f32 %v410, %v411
    %v413 = vtanh.pop %v412
    %v414 = vstv %s129
    %v415 = vmul.f32 %v294, %v414
    %v416 = vstv %s130
    %v417 = vmul.f32 %v311, %v416
    %v418 = vadd.f32 %v415, %v417
    %v419 = vstv %s131
    %v420 = vmul.f32 %v328, %v419
    %v421 = vadd.f32 %v418, %v420
    %v422 = vstv %s132
    %v423 = vmul.f32 %v345, %v422
    %v424 = vadd.f32 %v421, %v423
    %v425 = vstv %s133
    %v426 = vmul.f32 %v362, %v425
    %v427 = vadd.f32 %v424, %v426
    %v428 = vstv %s142
    %v429 = vadd.f32 %v427, %v428
    %v430 = vtanh.pop %v429
    %v431 = vstv %s134
    %v432 = vmul.f32 %v294, %v431
    %v433 = vstv %s135
    %v434 = vmul.f32 %v311, %v433
    %v435 = vadd.f32 %v432, %v434
    %v436 = vstv %s136
    %v437 = vmul.f32 %v328, %v436
    %v438 = vadd.f32 %v435, %v437
    %v439 = vstv %s137
    %v440 = vmul.f32 %v345, %v439
    %v441 = vadd.f32 %v438, %v440
    %v442 = vstv %s138
    %v443 = vmul.f32 %v362, %v442
    %v444 = vadd.f32 %v441, %v443
    %v445 = vstv %s143
    %v446 = vadd.f32 %v444, %v445
    %v447 = vtanh.pop %v446
    %v448 = vstv %s144
    %v449 = vmul.f32 %v379, %v448
    %v450 = vstv %s145
    %v451 = vmul.f32 %v396, %v450
    %v452 = vadd.f32 %v449, %v451
    %v453 = vstv %s146
    %v454 = vmul.f32 %v413, %v453
    %v455 = vadd.f32 %v452, %v454
    %v456 = vstv %s147
    %v457 = vmul.f32 %v430, %v456
    %v458 = vadd.f32 %v455, %v457
    %v459 = vstv %s148
    %v460 = vmul.f32 %v447, %v459
    %v461 = vadd.f32 %v458, %v460
    %v462 = vstv %s149
    %v463 = vadd.f32 %v461, %v462
    %464 = vst [vmem:[%s3] sm:$0xff] %v463
    // Predicated region
    $region22: #{diffusion_nn_forward.1} parent=1 // pred_check
      _
    $region23: #{diffusion_nn_forward.1} parent=1 // pred_check_branch
      %466 = sbr.rel (0) target = $region25
    $region24: #{diffusion_nn_forward.1} parent=1 // pred_region
      _
    $region25: #{diffusion_nn_forward.1} parent=1 // pred_fallthru
      _
    // Predicated region
    $region26: #{diffusion_nn_forward.1} parent=1 // pred_check
      _
    $region27: #{diffusion_nn_forward.1} parent=1 // pred_check_branch
      %468 = sbr.rel (0) target = $region29
    $region28: #{diffusion_nn_forward.1} parent=1 // pred_region
      _
    $region29: #{diffusion_nn_forward.1} parent=1 // pred_fallthru
      _
    %469 = vsyncpa [#allocation3], 1
    %470 = vsyncpa [#allocation5], 1

</llo_original>
